<compile_context>
chip_gen: v5e
topology: v5e:2x2
jax: 0.10.0
libtpu: 0.0.40
codegen_flags: <defaults>
</compile_context>

<pallas_src>
import math
import numpy as np
import jax
import jax.numpy as jnp
from jax.experimental import pallas as pl
from jax.experimental.pallas import tpu as pltpu


# ----------------------------------------------------------------------------
# Deterministic re-implementation of init_predefined_omega (module __init__)
# ----------------------------------------------------------------------------
def _sph2cart(theta, phi):
    return np.array(
        [np.sin(theta) * np.cos(phi),
         np.sin(theta) * np.sin(phi),
         np.cos(theta)],
        dtype=np.float32,
    )


def init_predefined_omega(num_theta, num_phi, type="full"):
    if type == "frontal":
        theta_list = np.linspace(0.0, np.pi / 2.0, num_theta, dtype=np.float32)
    else:  # 'full'
        theta_list = np.linspace(0.0, np.pi, num_theta, dtype=np.float32)
    phi_list = np.linspace(0.0, 2.0 * np.pi, num_phi, dtype=np.float32)

    omega, omega_la, omega_mu = [], [], []
    for theta in theta_list:
        for phi in phi_list:
            w = _sph2cart(theta, phi)
            w_la = _sph2cart(theta + np.pi / 2.0, phi)
            w_mu = np.cross(w_la, w).astype(np.float32)
            omega.append(w)
            omega_la.append(w_la)
            omega_mu.append(w_mu)

    return (np.stack(omega, 0).astype(np.float32),     # (K, 3)
            np.stack(omega_la, 0).astype(np.float32),
            np.stack(omega_mu, 0).astype(np.float32))


def _round_up(x, m):
    return ((x + m - 1) // m) * m


def _softplus(x):
    # Matches torch.nn.functional.softplus (threshold=20): exact linear branch
    # above the threshold, log(1+exp(x)) below (exp(20) ~ 4.9e8, safe in f32).
    return jnp.where(x > 20.0, x, jnp.log(1.0 + jnp.exp(jnp.minimum(x, 20.0))))


# ----------------------------------------------------------------------------
# Pallas kernel: ASG rendering-equation encoding hot path (folded layout)
# ----------------------------------------------------------------------------
def _ree_asg_kernel(bank_o_ref, bank_la_ref, bank_mu_ref, expand_ref,
                    wo_ref, a_ref, la_ref, mu_ref, out_ref):
    # Per-grid-step shapes (folded layout; FK / FKC are 128-multiples for the
    # common K=32, C=3 case, so every value below is fully lane-dense):
    #   bank_*_ref : (3F, FK)    block-diagonal direction banks
    #   expand_ref : (FK, FKC)   block-diagonal 0/1 channel-broadcast matrix
    #   wo_ref     : (TNf, 3F)   F packed outgoing directions per row
    #   a_ref/out  : (TNf, FKC)
    #   la/mu_ref  : (TNf, FK)
    f32 = jnp.float32
    wo = wo_ref[...].astype(f32)

    # Three small MXU matmuls; each result is lane-aligned (no lane slicing of
    # a fused (TNf, 3*FK) result at non-128 offsets).
    dot_o = jnp.dot(wo, bank_o_ref[...], preferred_element_type=f32)
    dot_la = jnp.dot(wo, bank_la_ref[...], preferred_element_type=f32)
    dot_mu = jnp.dot(wo, bank_mu_ref[...], preferred_element_type=f32)

    smooth = jnp.maximum(dot_o, 0.0)                          # relu(<w_o, w>)
    la = _softplus(la_ref[...].astype(f32) - 1.0)
    mu = _softplus(mu_ref[...].astype(f32) - 1.0)
    exp_in = -la * (dot_la * dot_la) - mu * (dot_mu * dot_mu)
    factor = smooth * jnp.exp(exp_in)                         # (TNf, FK)

    # Broadcast the per-(n, k) factor over the C channels packed on the lane
    # axis via an exact 0/1 block-diagonal expansion matmul.
    # TODO(synk): for very large K (>=128) this O(F*K^2*C) f32 matmul can
    #             become the binding unit on v5e; switch to a sublane repeat.
    factor_kc = jnp.dot(factor, expand_ref[...], preferred_element_type=f32)

    out_ref[...] = (a_ref[...].astype(f32) * factor_kc).astype(out_ref.dtype)


class RenderingEquationEncoding:
    """JAX/Pallas port of the PyTorch RenderingEquationEncoding module."""

    def __init__(self, num_theta, num_phi, type="asg"):
        self.num_theta = num_theta
        self.num_phi = num_phi
        sample_type = "frontal" if type == "lasg" else "full"
        omega, omega_la, omega_mu = init_predefined_omega(
            num_theta, num_phi, type=sample_type)
        self.K = num_theta * num_phi

        self._omega_np = omega                 # (K, 3) numpy constants
        self._omega_la_np = omega_la
        self._omega_mu_np = omega_mu

        # (1, T, P, 3) views for the pure-JAX reference path.
        self.omega = jnp.asarray(omega).reshape(1, num_theta, num_phi, 3)
        self.omega_la = jnp.asarray(omega_la).reshape(1, num_theta, num_phi, 3)
        self.omega_mu = jnp.asarray(omega_mu).reshape(1, num_theta, num_phi, 3)

        self._const_cache = {}

    # ------------------------------------------------------------------ #
    def _folded_consts(self, F, C):
        """Block-diagonal banks (3F, F*K) and 0/1 channel-broadcast expansion
        matrix (F*K, F*K*C) for fold factor F."""
        key = (F, C)
        if key not in self._const_cache:
            K = self.K

            def fold_bank(bank_k3):                       # (K, 3) -> (3F, FK)
                bt = bank_k3.T.astype(np.float32)         # (3, K)
                m = np.zeros((3 * F, F * K), np.float32)
                for f in range(F):
                    m[3 * f:3 * f + 3, f * K:(f + 1) * K] = bt
                return jnp.asarray(m)

            expand = np.zeros((F * K, F * K * C), np.float32)
            for j in range(F * K):                        # j = f*K + k
                expand[j, j * C:(j + 1) * C] = 1.0        # lanes f*KC + k*C + c
            self._const_cache[key] = (
                fold_bank(self._omega_np),
                fold_bank(self._omega_la_np),
                fold_bank(self._omega_mu_np),
                jnp.asarray(expand),
            )
        return self._const_cache[key]

    # ------------------------------------------------------------------ #
    def __call__(self, omega_o, a, la, mu, sg_type="asg", tile_n=8192):
        assert sg_type in ("asg", "lasg"), \
            "only the asg/lasg branch is implemented as a Pallas kernel"
        # TODO(synk): 'sg' / 'sg_angle' branches not implemented.

        N = omega_o.shape[0]
        T, P, K = self.num_theta, self.num_phi, self.K
        C = a.shape[-1]
        KC = K * C

        # ---- fold factor: largest power-of-two F <= 128/gcd(128, K) that
        # divides N, so F*K (and F*K*C) are 128-multiples when possible and
        # every reshape below is order-preserving (metadata only, no copy).
        F = 128 // math.gcd(128, K)
        while F > 1 and N % F != 0:
            F //= 2
        FK, FKC, F3 = F * K, F * KC, 3 * F
        Nf = N // F

        # Free reshapes only: no pad, no transpose, no slice copies.
        wo_f = omega_o.reshape(Nf, F3)
        a_f = a.reshape(Nf, FKC)
        la_f = la.reshape(Nf, FK)
        mu_f = mu.reshape(Nf, FK)

        bank_o, bank_la, bank_mu, expand = self._folded_consts(F, C)

        # ---- tile selection -------------------------------------------- #
        a_it = a.dtype.itemsize
        l_it = la.dtype.itemsize
        w_it = omega_o.dtype.itemsize
        row_bytes = 2 * FKC * a_it + 2 * FK * l_it + F3 * w_it  # a+out+la+mu+wo
        # Double-buffered working set <= ~32 MiB; leaves headroom under the
        # explicit 48 MiB scoped-VMEM limit below (v7x has 64 MiB physical
        # VMEM, v5e/v6e have 128 MiB, so this is safe on every generation).
        budget = 32 * 1024 * 1024
        rows_mem = max(8, ((budget // (2 * row_bytes)) // 8) * 8)
        rows_req = max(8, _round_up(max(tile_n // F, 1), 8))
        tile_rows = min(rows_mem, rows_req)
        if Nf > 4 * 8:
            # Keep >= ~4 grid steps so both TensorCores of a megacore part
            # (v7x) get work via the "parallel" grid axis.
            tile_rows = min(tile_rows, _round_up(pl.cdiv(Nf, 4), 8))
        if tile_rows >= Nf:
            tile_rows = Nf                     # single step: block == full dim
        grid = (pl.cdiv(Nf, tile_rows),)       # ragged last block: Pallas
                                               # masks OOB writes, no padding.

        cost = pl.CostEstimate(
            flops=int(Nf * (3 * 2 * F3 * FK + 2 * FK * FKC
                            + 20 * FK + 2 * FKC)),
            transcendentals=int(5 * N * K),
            bytes_accessed=int(Nf * row_bytes)
                           + int((3 * bank_o.size + expand.size) * 4),
        )

        out = pl.pallas_call(
            _ree_asg_kernel,
            out_shape=jax.ShapeDtypeStruct((Nf, FKC), a.dtype),
            grid=grid,
            in_specs=[
                pl.BlockSpec((F3, FK), lambda i: (0, 0)),          # bank_o
                pl.BlockSpec((F3, FK), lambda i: (0, 0)),          # bank_la
                pl.BlockSpec((F3, FK), lambda i: (0, 0)),          # bank_mu
                pl.BlockSpec((FK, FKC), lambda i: (0, 0)),         # expand
                pl.BlockSpec((tile_rows, F3), lambda i: (i, 0)),   # omega_o
                pl.BlockSpec((tile_rows, FKC), lambda i: (i, 0)),  # a
                pl.BlockSpec((tile_rows, FK), lambda i: (i, 0)),   # la
                pl.BlockSpec((tile_rows, FK), lambda i: (i, 0)),   # mu
            ],
            out_specs=pl.BlockSpec((tile_rows, FKC), lambda i: (i, 0)),
            compiler_params=pltpu.CompilerParams(
                dimension_semantics=("parallel",),
                vmem_limit_bytes=48 * 1024 * 1024),
            cost_estimate=cost,
        )(bank_o, bank_la, bank_mu, expand, wo_f, a_f, la_f, mu_f)

        # Free reshape back to the module's (N, T, P, C) output layout.
        return out.reshape(N, T, P, C)


# ----------------------------------------------------------------------------
# Pure-JAX reference (mirrors the PyTorch forward, asg/lasg branch)
# ----------------------------------------------------------------------------
def _reference_asg(module, omega_o, a, la, mu):
    wo = omega_o[:, None, None, :]                                # (N,1,1,3)
    smooth = jax.nn.relu(jnp.sum(wo * module.omega, -1, keepdims=True))
    la_s = jax.nn.softplus(la - 1.0)
    mu_s = jax.nn.softplus(mu - 1.0)
    exp_in = (-la_s * jnp.sum(module.omega_la * wo, -1, keepdims=True) ** 2
              - mu_s * jnp.sum(module.omega_mu * wo, -1, keepdims=True) ** 2)
    return a * smooth * jnp.exp(exp_in)


if __name__ == "__main__":
    num_theta, num_phi = 4, 8        # K = 32 directions
    N, C = 260, 3                    # exercises folding (F=4), a multi-step
                                     # grid and a ragged last block (no pad)

    module = RenderingEquationEncoding(num_theta, num_phi, type="asg")

    key = jax.random.PRNGKey(0)
    k0, k1, k2, k3 = jax.random.split(key, 4)
    omega_o = jax.random.normal(k0, (N, 3), dtype=jnp.float32)
    omega_o = omega_o / jnp.linalg.norm(omega_o, axis=-1, keepdims=True)
    a = jax.random.normal(k1, (N, num_theta, num_phi, C), dtype=jnp.float32)
    la = jax.random.normal(k2, (N, num_theta, num_phi, 1), dtype=jnp.float32)
    mu = jax.random.normal(k3, (N, num_theta, num_phi, 1), dtype=jnp.float32)

    out = module(omega_o, a, la, mu, sg_type="asg")
    out = jax.block_until_ready(out)

    ref = _reference_asg(module, omega_o, a, la, mu)
    assert out.shape == (N, num_theta, num_phi, C)
    assert jnp.allclose(out, ref, atol=1e-4, rtol=1e-4), "mismatch vs reference"

    print("KERNEL_OK")
</pallas_src>

<mosaic_0001>
module attributes {stable_mosaic.version = 11 : i64} {
  func.func @_ree_asg_kernel(%arg0: i32, %arg1: memref<12x128xf32, #tpu.memory_space<vmem>>, %arg2: memref<12x128xf32, #tpu.memory_space<vmem>>, %arg3: memref<12x128xf32, #tpu.memory_space<vmem>>, %arg4: memref<128x384xf32, #tpu.memory_space<vmem>>, %arg5: memref<24x12xf32, #tpu.memory_space<vmem>>, %arg6: memref<24x384xf32, #tpu.memory_space<vmem>>, %arg7: memref<24x128xf32, #tpu.memory_space<vmem>>, %arg8: memref<24x128xf32, #tpu.memory_space<vmem>>, %arg9: memref<24x384xf32, #tpu.memory_space<vmem>>) attributes {dimension_semantics = [#tpu.dimension_semantics<parallel>], iteration_bounds = array<i64: 3>, scalar_prefetch = 0 : i64, scratch_operands = 0 : i64, tpu.core_type = #tpu.core_type<tc>, window_params = [{pipeline_mode = #tpu.pipeline_mode<synchronous>, transform_indices = @transform_0, window_bounds = array<i64: 12, 128>}, {pipeline_mode = #tpu.pipeline_mode<synchronous>, transform_indices = @transform_1, window_bounds = array<i64: 12, 128>}, {pipeline_mode = #tpu.pipeline_mode<synchronous>, transform_indices = @transform_2, window_bounds = array<i64: 12, 128>}, {pipeline_mode = #tpu.pipeline_mode<synchronous>, transform_indices = @transform_3, window_bounds = array<i64: 128, 384>}, {transform_indices = @transform_4, window_bounds = array<i64: 24, 12>}, {transform_indices = @transform_5, window_bounds = array<i64: 24, 384>}, {transform_indices = @transform_6, window_bounds = array<i64: 24, 128>}, {transform_indices = @transform_7, window_bounds = array<i64: 24, 128>}, {transform_indices = @transform_8, window_bounds = array<i64: 24, 384>}]} {
    %c0 = arith.constant 0 : index
    %c0_0 = arith.constant 0 : index
    %0 = vector.load %arg5[%c0, %c0_0] : memref<24x12xf32, #tpu.memory_space<vmem>>, vector<24x12xf32>
    %c0_1 = arith.constant 0 : index
    %c0_2 = arith.constant 0 : index
    %1 = vector.load %arg1[%c0_1, %c0_2] : memref<12x128xf32, #tpu.memory_space<vmem>>, vector<12x128xf32>
    %cst = arith.constant dense<0.000000e+00> : vector<24x128xf32>
    %2 = tpu.matmul %0, %1, %cst {dimension_numbers = #tpu.dot_dimension_numbers<[1], [0], [0], [1], [0, 0, 1, 1], [], []>} : vector<24x12xf32>, vector<12x128xf32>, vector<24x128xf32> -> vector<24x128xf32>
    %c0_3 = arith.constant 0 : index
    %c0_4 = arith.constant 0 : index
    %3 = vector.load %arg2[%c0_3, %c0_4] : memref<12x128xf32, #tpu.memory_space<vmem>>, vector<12x128xf32>
    %cst_5 = arith.constant dense<0.000000e+00> : vector<24x128xf32>
    %4 = tpu.matmul %0, %3, %cst_5 {dimension_numbers = #tpu.dot_dimension_numbers<[1], [0], [0], [1], [0, 0, 1, 1], [], []>} : vector<24x12xf32>, vector<12x128xf32>, vector<24x128xf32> -> vector<24x128xf32>
    %c0_6 = arith.constant 0 : index
    %c0_7 = arith.constant 0 : index
    %5 = vector.load %arg3[%c0_6, %c0_7] : memref<12x128xf32, #tpu.memory_space<vmem>>, vector<12x128xf32>
    %cst_8 = arith.constant dense<0.000000e+00> : vector<24x128xf32>
    %6 = tpu.matmul %0, %5, %cst_8 {dimension_numbers = #tpu.dot_dimension_numbers<[1], [0], [0], [1], [0, 0, 1, 1], [], []>} : vector<24x12xf32>, vector<12x128xf32>, vector<24x128xf32> -> vector<24x128xf32>
    %cst_9 = arith.constant 0.000000e+00 : f32
    %7 = vector.broadcast %cst_9 : f32 to vector<24x128xf32>
    %8 = arith.maximumf %2, %7 : vector<24x128xf32>
    %c0_10 = arith.constant 0 : index
    %c0_11 = arith.constant 0 : index
    %9 = vector.load %arg7[%c0_10, %c0_11] : memref<24x128xf32, #tpu.memory_space<vmem>>, vector<24x128xf32>
    %cst_12 = arith.constant 1.000000e+00 : f32
    %10 = vector.broadcast %cst_12 : f32 to vector<24x128xf32>
    %11 = arith.subf %9, %10 : vector<24x128xf32>
    %cst_13 = arith.constant 2.000000e+01 : f32
    %12 = vector.broadcast %cst_13 : f32 to vector<24x128xf32>
    %13 = arith.cmpf ogt, %11, %12 : vector<24x128xf32>
    %cst_14 = arith.constant 2.000000e+01 : f32
    %14 = vector.broadcast %cst_14 : f32 to vector<24x128xf32>
    %15 = arith.minimumf %11, %14 : vector<24x128xf32>
    %16 = math.exp %15 : vector<24x128xf32>
    %cst_15 = arith.constant 1.000000e+00 : f32
    %17 = vector.broadcast %cst_15 : f32 to vector<24x128xf32>
    %18 = arith.addf %17, %16 : vector<24x128xf32>
    %19 = math.log %18 : vector<24x128xf32>
    %20 = arith.select %13, %11, %19 : vector<24x128xi1>, vector<24x128xf32>
    %c0_16 = arith.constant 0 : index
    %c0_17 = arith.constant 0 : index
    %21 = vector.load %arg8[%c0_16, %c0_17] : memref<24x128xf32, #tpu.memory_space<vmem>>, vector<24x128xf32>
    %cst_18 = arith.constant 1.000000e+00 : f32
    %22 = vector.broadcast %cst_18 : f32 to vector<24x128xf32>
    %23 = arith.subf %21, %22 : vector<24x128xf32>
    %cst_19 = arith.constant 2.000000e+01 : f32
    %24 = vector.broadcast %cst_19 : f32 to vector<24x128xf32>
    %25 = arith.cmpf ogt, %23, %24 : vector<24x128xf32>
    %cst_20 = arith.constant 2.000000e+01 : f32
    %26 = vector.broadcast %cst_20 : f32 to vector<24x128xf32>
    %27 = arith.minimumf %23, %26 : vector<24x128xf32>
    %28 = math.exp %27 : vector<24x128xf32>
    %cst_21 = arith.constant 1.000000e+00 : f32
    %29 = vector.broadcast %cst_21 : f32 to vector<24x128xf32>
    %30 = arith.addf %29, %28 : vector<24x128xf32>
    %31 = math.log %30 : vector<24x128xf32>
    %32 = arith.select %25, %23, %31 : vector<24x128xi1>, vector<24x128xf32>
    %cst_22 = arith.constant 0.000000e+00 : f32
    %33 = vector.broadcast %cst_22 : f32 to vector<24x128xf32>
    %34 = arith.subf %33, %20 : vector<24x128xf32>
    %35 = arith.mulf %4, %4 : vector<24x128xf32>
    %36 = arith.mulf %34, %35 : vector<24x128xf32>
    %37 = arith.mulf %6, %6 : vector<24x128xf32>
    %38 = arith.mulf %32, %37 : vector<24x128xf32>
    %39 = arith.subf %36, %38 : vector<24x128xf32>
    %40 = math.exp %39 : vector<24x128xf32>
    %41 = arith.mulf %8, %40 : vector<24x128xf32>
    %c0_23 = arith.constant 0 : index
    %c0_24 = arith.constant 0 : index
    %42 = vector.load %arg4[%c0_23, %c0_24] : memref<128x384xf32, #tpu.memory_space<vmem>>, vector<128x384xf32>
    %cst_25 = arith.constant dense<0.000000e+00> : vector<24x384xf32>
    %43 = tpu.matmul %41, %42, %cst_25 {dimension_numbers = #tpu.dot_dimension_numbers<[1], [0], [0], [1], [0, 0, 1, 1], [], []>} : vector<24x128xf32>, vector<128x384xf32>, vector<24x384xf32> -> vector<24x384xf32>
    %c0_26 = arith.constant 0 : index
    %c0_27 = arith.constant 0 : index
    %44 = vector.load %arg6[%c0_26, %c0_27] : memref<24x384xf32, #tpu.memory_space<vmem>>, vector<24x384xf32>
    %45 = arith.mulf %44, %43 : vector<24x384xf32>
    %c0_28 = arith.constant 0 : index
    %c0_29 = arith.constant 0 : index
    %46 = vector.load %arg9[%c0_28, %c0_29] : memref<24x384xf32, #tpu.memory_space<vmem>>, vector<24x384xf32>
    tpu.vector_store %arg9[%c0_28, %c0_29], %45 {strides = array<i32>} : memref<24x384xf32, #tpu.memory_space<vmem>>, vector<24x384xf32>,
    return
  }
  func.func @transform_0(%arg0: i32) -> (i32, i32) {
    %c0_i32 = arith.constant 0 : i32
    %c0_i32_0 = arith.constant 0 : i32
    %c0_i32_1 = arith.constant 0 : i32
    return %c0_i32, %c0_i32_0 : i32, i32
  }
  func.func @transform_1(%arg0: i32) -> (i32, i32) {
    %c0_i32 = arith.constant 0 : i32
    %c0_i32_0 = arith.constant 0 : i32
    %c0_i32_1 = arith.constant 0 : i32
    return %c0_i32, %c0_i32_0 : i32, i32
  }
  func.func @transform_2(%arg0: i32) -> (i32, i32) {
    %c0_i32 = arith.constant 0 : i32
    %c0_i32_0 = arith.constant 0 : i32
    %c0_i32_1 = arith.constant 0 : i32
    return %c0_i32, %c0_i32_0 : i32, i32
  }
  func.func @transform_3(%arg0: i32) -> (i32, i32) {
    %c0_i32 = arith.constant 0 : i32
    %c0_i32_0 = arith.constant 0 : i32
    %c0_i32_1 = arith.constant 0 : i32
    return %c0_i32, %c0_i32_0 : i32, i32
  }
  func.func @transform_4(%arg0: i32) -> (i32, i32) {
    %c0_i32 = arith.constant 0 : i32
    %c0_i32_0 = arith.constant 0 : i32
    return %arg0, %c0_i32 : i32, i32
  }
  func.func @transform_5(%arg0: i32) -> (i32, i32) {
    %c0_i32 = arith.constant 0 : i32
    %c0_i32_0 = arith.constant 0 : i32
    return %arg0, %c0_i32 : i32, i32
  }
  func.func @transform_6(%arg0: i32) -> (i32, i32) {
    %c0_i32 = arith.constant 0 : i32
    %c0_i32_0 = arith.constant 0 : i32
    return %arg0, %c0_i32 : i32, i32
  }
  func.func @transform_7(%arg0: i32) -> (i32, i32) {
    %c0_i32 = arith.constant 0 : i32
    %c0_i32_0 = arith.constant 0 : i32
    return %arg0, %c0_i32 : i32, i32
  }
  func.func @transform_8(%arg0: i32) -> (i32, i32) {
    %c0_i32 = arith.constant 0 : i32
    %c0_i32_0 = arith.constant 0 : i32
    return %arg0, %c0_i32 : i32, i32
  }
}

</mosaic_0001>

<llo_original>
// kernel: tpu_custom_call.1
$region0: #{tpu_custom_call.1}
  #allocation0 [shape = 'u32[]', space=smem, size = 0x4, offset = 0x4, fixed_abs, tag = 'smem constant byte address 0x4 - core index']
  #allocation1 [shape = 'u32[72,128]{1,0:T(1,128)}', space=vmem, size = 0x9000, scoped, tag = 'internal scratch']
  %s0 = inlined_call_operand.vmem [shape: f32[12,128], index: 0, kind: input, shape index: {}]
  %s1 = inlined_call_operand.hbm [shape: f32[12,128], index: 1, kind: input, shape index: {}]
  %s2 = inlined_call_operand.hbm [shape: f32[12,128], index: 2, kind: input, shape index: {}]
  %s3 = inlined_call_operand.hbm [shape: f32[128,384], index: 3, kind: input, shape index: {}]
  %s4 = inlined_call_operand.vmem [shape: f32[65,12], index: 4, kind: input, shape index: {}]
  %s5 = inlined_call_operand.hbm [shape: f32[65,384], index: 5, kind: input, shape index: {}]
  %s6 = inlined_call_operand.vmem [shape: f32[65,128], index: 6, kind: input, shape index: {}]
  %s7 = inlined_call_operand.hbm [shape: f32[65,128], index: 7, kind: input, shape index: {}]
  %s8 = inlined_call_operand.hbm [shape: f32[65,384], index: 8, kind: output, shape index: {}]
  %s9 = sld [smem:[#allocation0]]
  $region85: #{tpu_custom_call.1} parent=0
    _
  %s11 = ssub.s32 1, %s9
  %s12 = scalar_select 0, %s11, %s9
  $region1: #{tpu_custom_call.1} parent=0
    #allocation2 [shape = 'u8[8192]{0}', space=vmem, size = 0x2000, scoped, tag = 'input window, operand 1, single buffered']
    #allocation3 [shape = 's32[2]{0}', space=sflag, size = 0x8, scoped, tag = 'scoped memory for tpu_custom_call.1']
    #allocation4 [shape = 's32[2]{0}', space=sflag, size = 0x8, scoped, tag = 'scoped memory for tpu_custom_call.1']
    #allocation5 [shape = 'u8[8192]{0}', space=vmem, size = 0x2000, scoped, tag = 'input window, operand 2, single buffered']
    #allocation6 [shape = 's32[1]{0}', space=sflag, size = 0x4, scoped, tag = 'scoped memory for tpu_custom_call.1']
    #allocation7 [shape = 'u8[196608]{0}', space=vmem, size = 0x30000, scoped, tag = 'input window, operand 3, single buffered']
    #allocation8 [shape = 'u8[73728]{0}', space=vmem, size = 0x12000, scoped, tag = 'input window, operand 5']
    #allocation9 [shape = 's32[2]{0}', space=sflag, size = 0x8, scoped, tag = 'scoped memory for tpu_custom_call.1']
    #allocation10 [shape = 'u8[24576]{0}', space=vmem, size = 0x6000, scoped, tag = 'input window, operand 7']
    #allocation11 [shape = 'u8[73728]{0}', space=vmem, size = 0x12000, scoped, tag = 'output window, operand 0']
    %13 = vsyncpa [#allocation3], 0
    %14 = vsyncpa [#allocation6], 0
    %15 = vsyncpa [#allocation9], 0
    %s16 = scalar_lea.sflag [#allocation9], 1
    %17 = vsyncpa %s16, 0
    %18 = vsyncpa [#allocation4], 0
    %s19 = scalar_lea.sflag [#allocation4], 1
    %20 = vsyncpa %s19, 0
    loop: start=0, step=1, limit=5
    $region2: #{tpu_custom_call.1} parent=1 // loop_pre_header
      _
    $region3: #{tpu_custom_call.1} parent=1 // loop_header
      %s22 = sphi 0, %s26
      %p23 = scmp.ge.s32.totalorder %s22, 5
      %s30 = sphi 0, %s30
      %s32 = sphi 0, %s30
      %s33 = sphi 0, %s32
      %s47 = sphi 0, %s33
      %s51 = sphi 0, %s51
      %s53 = sphi 0, %s51
      %s54 = sphi 0, %s53
      %s68 = sphi 0, %s54
      %s72 = sphi 0, %s72
      %s74 = sphi 0, %s72
      %s75 = sphi 0, %s74
      %s89 = sphi 0, %s75
      %s93 = sphi 0, %s93
      %s95 = sphi 0, %s93
      %s96 = sphi 0, %s95
      %s110 = sphi 0, %s96
      %s116 = sphi 0, %s118
      %s119 = sphi 0, %s116
      %s120 = sphi 0, %s119
      %s136 = sphi 0, %s120
      %s142 = sphi 0, %s144
      %s145 = sphi 0, %s142
      %s146 = sphi 0, %s145
      %s162 = sphi 0, %s146
      %s168 = sphi 0, %s170
      %s171 = sphi 0, %s168
      %s172 = sphi 0, %s171
      %s188 = sphi 0, %s172
      %s194 = sphi 0, %s196
      %s197 = sphi 0, %s194
      %s198 = sphi 0, %s197
      %s214 = sphi 0, %s198
      %s220 = sphi 0, %s222
      %s223 = sphi 0, %s220
      %s224 = sphi 0, %s223
      %s240 = sphi 0, %s224
    $region4: #{tpu_custom_call.1} parent=1 // loop_header_branch
      %25 = sbr.rel (%p23) target = $region8
    $region5: #{tpu_custom_call.1} parent=1 // loop_body
      %s27 = ssub.s32 %s22, 1
      %s28 = ssub.s32 %s22, 2
      %s29 = sadd.s32 %s22, 1
      %s31 = sadd.s32 %s30, 1
      %p34 = scmp.eq.s32.totalorder %s22, 2
      %p35 = scmp.ne.s32.totalorder %s30, %s32
      %p36 = scmp.eq.s32.totalorder %s22, 0
      %p37 = por %p35, %p36
      %p38 = scmp.ne.s32.totalorder %s30, %s32
      %p39 = scmp.eq.s32.totalorder %s27, 2
      %p40 = por %p38, %p39
      %p41 = scmp.ne.s32.totalorder %s32, %s33
      %p42 = scmp.eq.s32.totalorder %s27, 0
      %p43 = por %p41, %p42
      %p44 = scmp.ne.s32.totalorder %s32, %s33
      %p45 = scmp.eq.s32.totalorder %s28, 2
      %p46 = por %p44, %p45
      %p48 = scmp.ne.s32.totalorder %s33, %s47
      %p49 = scmp.eq.s32.totalorder %s28, 0
      %p50 = por %p48, %p49
      %s52 = sadd.s32 %s51, 1
      %p55 = scmp.eq.s32.totalorder %s22, 2
      %p56 = scmp.ne.s32.totalorder %s51, %s53
      %p57 = scmp.eq.s32.totalorder %s22, 0
      %p58 = por %p56, %p57
      %p59 = scmp.ne.s32.totalorder %s51, %s53
      %p60 = scmp.eq.s32.totalorder %s27, 2
      %p61 = por %p59, %p60
      %p62 = scmp.ne.s32.totalorder %s53, %s54
      %p63 = scmp.eq.s32.totalorder %s27, 0
      %p64 = por %p62, %p63
      %p65 = scmp.ne.s32.totalorder %s53, %s54
      %p66 = scmp.eq.s32.totalorder %s28, 2
      %p67 = por %p65, %p66
      %p69 = scmp.ne.s32.totalorder %s54, %s68
      %p70 = scmp.eq.s32.totalorder %s28, 0
      %p71 = por %p69, %p70
      %s73 = sadd.s32 %s72, 1
      %p76 = scmp.eq.s32.totalorder %s22, 2
      %p77 = scmp.ne.s32.totalorder %s72, %s74
      %p78 = scmp.eq.s32.totalorder %s22, 0
      %p79 = por %p77, %p78
      %p80 = scmp.ne.s32.totalorder %s72, %s74
      %p81 = scmp.eq.s32.totalorder %s27, 2
      %p82 = por %p80, %p81
      %p83 = scmp.ne.s32.totalorder %s74, %s75
      %p84 = scmp.eq.s32.totalorder %s27, 0
      %p85 = por %p83, %p84
      %p86 = scmp.ne.s32.totalorder %s74, %s75
      %p87 = scmp.eq.s32.totalorder %s28, 2
      %p88 = por %p86, %p87
      %p90 = scmp.ne.s32.totalorder %s75, %s89
      %p91 = scmp.eq.s32.totalorder %s28, 0
      %p92 = por %p90, %p91
      %s94 = sadd.s32 %s93, 1
      %p97 = scmp.eq.s32.totalorder %s22, 2
      %p98 = scmp.ne.s32.totalorder %s93, %s95
      %p99 = scmp.eq.s32.totalorder %s22, 0
      %p100 = por %p98, %p99
      %p101 = scmp.ne.s32.totalorder %s93, %s95
      %p102 = scmp.eq.s32.totalorder %s27, 2
      %p103 = por %p101, %p102
      %p104 = scmp.ne.s32.totalorder %s95, %s96
      %p105 = scmp.eq.s32.totalorder %s27, 0
      %p106 = por %p104, %p105
      %p107 = scmp.ne.s32.totalorder %s95, %s96
      %p108 = scmp.eq.s32.totalorder %s28, 2
      %p109 = por %p107, %p108
      %p111 = scmp.ne.s32.totalorder %s96, %s110
      %p112 = scmp.eq.s32.totalorder %s28, 0
      %p113 = por %p111, %p112
      %s114 = ssub.s32 %s22, %s29
      %p115 = scmp.eq.s32.totalorder %s114, 0
      %s117 = sadd.s32 %s116, 1
      %s118 = scalar_select %p115, %s116, %s117
      %p121 = pneg %p115
      %p122 = scmp.eq.s32.totalorder %s22, 2
      %p123 = por %p121, %p122
      %p124 = scmp.ne.s32.totalorder %s116, %s119
      %p125 = scmp.eq.s32.totalorder %s22, 0
      %p126 = por %p124, %p125
      %p127 = scmp.ne.s32.totalorder %s116, %s119
      %p128 = scmp.eq.s32.totalorder %s27, 2
      %p129 = por %p127, %p128
      %p130 = scmp.ne.s32.totalorder %s119, %s120
      %p131 = scmp.eq.s32.totalorder %s27, 0
      %p132 = por %p130, %p131
      %p133 = scmp.ne.s32.totalorder %s119, %s120
      %p134 = scmp.eq.s32.totalorder %s28, 2
      %p135 = por %p133, %p134
      %p137 = scmp.ne.s32.totalorder %s120, %s136
      %p138 = scmp.eq.s32.totalorder %s28, 0
      %p139 = por %p137, %p138
      %s140 = ssub.s32 %s22, %s29
      %p141 = scmp.eq.s32.totalorder %s140, 0
      %s143 = sadd.s32 %s142, 1
      %s144 = scalar_select %p141, %s142, %s143
      %p147 = pneg %p141
      %p148 = scmp.eq.s32.totalorder %s22, 2
      %p149 = por %p147, %p148
      %p150 = scmp.ne.s32.totalorder %s142, %s145
      %p151 = scmp.eq.s32.totalorder %s22, 0
      %p152 = por %p150, %p151
      %p153 = scmp.ne.s32.totalorder %s142, %s145
      %p154 = scmp.eq.s32.totalorder %s27, 2
      %p155 = por %p153, %p154
      %p156 = scmp.ne.s32.totalorder %s145, %s146
      %p157 = scmp.eq.s32.totalorder %s27, 0
      %p158 = por %p156, %p157
      %p159 = scmp.ne.s32.totalorder %s145, %s146
      %p160 = scmp.eq.s32.totalorder %s28, 2
      %p161 = por %p159, %p160
      %p163 = scmp.ne.s32.totalorder %s146, %s162
      %p164 = scmp.eq.s32.totalorder %s28, 0
      %p165 = por %p163, %p164
      %s166 = ssub.s32 %s22, %s29
      %p167 = scmp.eq.s32.totalorder %s166, 0
      %s169 = sadd.s32 %s168, 1
      %s170 = scalar_select %p167, %s168, %s169
      %p173 = pneg %p167
      %p174 = scmp.eq.s32.totalorder %s22, 2
      %p175 = por %p173, %p174
      %p176 = scmp.ne.s32.totalorder %s168, %s171
      %p177 = scmp.eq.s32.totalorder %s22, 0
      %p178 = por %p176, %p177
      %p179 = scmp.ne.s32.totalorder %s168, %s171
      %p180 = scmp.eq.s32.totalorder %s27, 2
      %p181 = por %p179, %p180
      %p182 = scmp.ne.s32.totalorder %s171, %s172
      %p183 = scmp.eq.s32.totalorder %s27, 0
      %p184 = por %p182, %p183
      %p185 = scmp.ne.s32.totalorder %s171, %s172
      %p186 = scmp.eq.s32.totalorder %s28, 2
      %p187 = por %p185, %p186
      %p189 = scmp.ne.s32.totalorder %s172, %s188
      %p190 = scmp.eq.s32.totalorder %s28, 0
      %p191 = por %p189, %p190
      %s192 = ssub.s32 %s22, %s29
      %p193 = scmp.eq.s32.totalorder %s192, 0
      %s195 = sadd.s32 %s194, 1
      %s196 = scalar_select %p193, %s194, %s195
      %p199 = pneg %p193
      %p200 = scmp.eq.s32.totalorder %s22, 2
      %p201 = por %p199, %p200
      %p202 = scmp.ne.s32.totalorder %s194, %s197
      %p203 = scmp.eq.s32.totalorder %s22, 0
      %p204 = por %p202, %p203
      %p205 = scmp.ne.s32.totalorder %s194, %s197
      %p206 = scmp.eq.s32.totalorder %s27, 2
      %p207 = por %p205, %p206
      %p208 = scmp.ne.s32.totalorder %s197, %s198
      %p209 = scmp.eq.s32.totalorder %s27, 0
      %p210 = por %p208, %p209
      %p211 = scmp.ne.s32.totalorder %s197, %s198
      %p212 = scmp.eq.s32.totalorder %s28, 2
      %p213 = por %p211, %p212
      %p215 = scmp.ne.s32.totalorder %s198, %s214
      %p216 = scmp.eq.s32.totalorder %s28, 0
      %p217 = por %p215, %p216
      %s218 = ssub.s32 %s22, %s29
      %p219 = scmp.eq.s32.totalorder %s218, 0
      %s221 = sadd.s32 %s220, 1
      %s222 = scalar_select %p219, %s220, %s221
      %p225 = pneg %p219
      %p226 = scmp.eq.s32.totalorder %s22, 2
      %p227 = por %p225, %p226
      %p228 = scmp.ne.s32.totalorder %s220, %s223
      %p229 = scmp.eq.s32.totalorder %s22, 0
      %p230 = por %p228, %p229
      %p231 = scmp.ne.s32.totalorder %s220, %s223
      %p232 = scmp.eq.s32.totalorder %s27, 2
      %p233 = por %p231, %p232
      %p234 = scmp.ne.s32.totalorder %s223, %s224
      %p235 = scmp.eq.s32.totalorder %s27, 0
      %p236 = por %p234, %p235
      %p237 = scmp.ne.s32.totalorder %s223, %s224
      %p238 = scmp.eq.s32.totalorder %s28, 2
      %p239 = por %p237, %p238
      %p241 = scmp.ne.s32.totalorder %s224, %s240
      %p242 = scmp.eq.s32.totalorder %s28, 0
      %p243 = por %p241, %p242
      %p244 = scmp.le.s32.totalorder 1, %s22
      %p245 = scmp.lt.s32.totalorder %s22, 4
      %p246 = pnand %p244, %p245
      %p247 = pneg %p246
      // Predicated region
      $region9: #{tpu_custom_call.1} parent=5 // pred_check
        _
      $region10: #{tpu_custom_call.1} parent=5 // pred_check_branch
        %249 = sbr.rel (%p246) target = $region12
      $region11: #{tpu_custom_call.1} parent=5 // pred_region
        %s250 = ssub.s32 %s22, 1
        // Predicated region
        $region13: #{tpu_custom_call.1} parent=11 // pred_check
          %p251 = pneg %p43
        $region14: #{tpu_custom_call.1} parent=11 // pred_check_branch
          %253 = sbr.rel (%p251) target = $region16
        $region15: #{tpu_custom_call.1} parent=11 // pred_region
          _
        $region16: #{tpu_custom_call.1} parent=11 // pred_fallthru
          _
        // Predicated region
        $region17: #{tpu_custom_call.1} parent=11 // pred_check
          %p254 = pneg %p64
        $region18: #{tpu_custom_call.1} parent=11 // pred_check_branch
          %256 = sbr.rel (%p254) target = $region20
        $region19: #{tpu_custom_call.1} parent=11 // pred_region
          %258 = vsyncadd [#allocation3], 0
          %s259 = sshll.u32 %s1, 4
          %s260 = int_to_ptr.hbm [resolvable:$true] %s259
          %s261 = sshll.u32 [#allocation2], 4
          %s262 = int_to_ptr.vmem [resolvable:$true] %s261
          %267 = dma.hbm_to_vmem [thread:$0]  %s260, 256, %s262, [#allocation3], 128, 128, 8
        $region20: #{tpu_custom_call.1} parent=11 // pred_fallthru
          _
        // Predicated region
        $region21: #{tpu_custom_call.1} parent=11 // pred_check
          %p268 = pneg %p85
        $region22: #{tpu_custom_call.1} parent=11 // pred_check_branch
          %270 = sbr.rel (%p268) target = $region24
        $region23: #{tpu_custom_call.1} parent=11 // pred_region
          %272 = vsyncadd [#allocation6], 0
          %s273 = sshll.u32 %s2, 4
          %s274 = int_to_ptr.hbm [resolvable:$true] %s273
          %s275 = sshll.u32 [#allocation5], 4
          %s276 = int_to_ptr.vmem [resolvable:$true] %s275
          %281 = dma.hbm_to_vmem [thread:$0]  %s274, 256, %s276, [#allocation6], 128, 128, 8
        $region24: #{tpu_custom_call.1} parent=11 // pred_fallthru
          _
        // Predicated region
        $region25: #{tpu_custom_call.1} parent=11 // pred_check
          %p282 = pneg %p106
        $region26: #{tpu_custom_call.1} parent=11 // pred_check_branch
          %284 = sbr.rel (%p282) target = $region28
        $region27: #{tpu_custom_call.1} parent=11 // pred_region
          %286 = vsyncadd [#allocation6], 0
          %s287 = sshll.u32 %s3, 4
          %s288 = int_to_ptr.hbm [resolvable:$true] %s287
          %s289 = sshll.u32 [#allocation7], 4
          %s290 = int_to_ptr.vmem [resolvable:$true] %s289
          %295 = dma.hbm_to_vmem [thread:$0]  %s288, 6144, %s290, [#allocation6], 384, 384, 24
        $region28: #{tpu_custom_call.1} parent=11 // pred_fallthru
          _
      $region12: #{tpu_custom_call.1} parent=5 // pred_fallthru
        _
      %p296 = scmp.lt.s32.totalorder %s22, 3
      // Predicated region
      $region29: #{tpu_custom_call.1} parent=5 // pred_check
        %p297 = pneg %p296
      $region30: #{tpu_custom_call.1} parent=5 // pred_check_branch
        %299 = sbr.rel (%p297) target = $region32
      $region31: #{tpu_custom_call.1} parent=5 // pred_region
        // Predicated region
        $region33: #{tpu_custom_call.1} parent=31 // pred_check
          %p300 = pneg %p126
        $region34: #{tpu_custom_call.1} parent=31 // pred_check_branch
          %302 = sbr.rel (%p300) target = $region36
        $region35: #{tpu_custom_call.1} parent=31 // pred_region
          %s303 = smul.u32 3, %s22
          %p304 = scmp.lt.s32.totalorder %s303, 8
          %s305 = scalar_select %p304, %s303, 8
          %s306 = smul.addr %s305, 8
          %s307 = scalar_lea.vmem %s4, %s306
          %s308 = smul.u32 3, %s22
        $region36: #{tpu_custom_call.1} parent=31 // pred_fallthru
          _
        // Predicated region
        $region37: #{tpu_custom_call.1} parent=31 // pred_check
          %p309 = pneg %p152
        $region38: #{tpu_custom_call.1} parent=31 // pred_check_branch
          %311 = sbr.rel (%p309) target = $region40
        $region39: #{tpu_custom_call.1} parent=31 // pred_region
          %s312 = sand.u32 %s22, 1
          %s313 = scalar_lea.sflag [#allocation9], %s312
          %s314 = sand.u32 %s142, 1
          %s315 = smul.addr %s314, 72
          %s316 = scalar_lea.vmem [#allocation8], %s315
          %s317 = smul.u32 3, %s22
          %319 = vsyncadd %s313, 0
          %s320 = smul.addr %s317, 3
          %s321 = smul.addr %s320, 8
          %s322 = scalar_lea.hbm %s5, %s321
          %s323 = sshll.u32 %s322, 4
          %s324 = int_to_ptr.hbm [resolvable:$true] %s323
          %s325 = sshll.u32 %s316, 4
          %s326 = int_to_ptr.vmem [resolvable:$true] %s325
          %331 = dma.hbm_to_vmem [thread:$0]  %s324, 1152, %s326, %s313, 384, 384, 24
        $region40: #{tpu_custom_call.1} parent=31 // pred_fallthru
          _
        // Predicated region
        $region41: #{tpu_custom_call.1} parent=31 // pred_check
          %p332 = pneg %p178
        $region42: #{tpu_custom_call.1} parent=31 // pred_check_branch
          %334 = sbr.rel (%p332) target = $region44
        $region43: #{tpu_custom_call.1} parent=31 // pred_region
          %s335 = smul.u32 3, %s22
          %p336 = scmp.lt.s32.totalorder %s335, 8
          %s337 = scalar_select %p336, %s335, 8
          %s338 = smul.addr %s337, 8
          %s339 = scalar_lea.vmem %s6, %s338
          %s340 = smul.u32 3, %s22
        $region44: #{tpu_custom_call.1} parent=31 // pred_fallthru
          _
        // Predicated region
        $region45: #{tpu_custom_call.1} parent=31 // pred_check
          %p341 = pneg %p204
        $region46: #{tpu_custom_call.1} parent=31 // pred_check_branch
          %343 = sbr.rel (%p341) target = $region48
        $region47: #{tpu_custom_call.1} parent=31 // pred_region
          %s344 = sand.u32 %s22, 1
          %s345 = scalar_lea.sflag [#allocation9], %s344
          %s346 = sand.u32 %s194, 1
          %s347 = smul.addr %s346, 24
          %s348 = scalar_lea.vmem [#allocation10], %s347
          %s349 = smul.u32 3, %s22
          %351 = vsyncadd %s345, 0
          %s352 = smul.addr %s349, 8
          %s353 = scalar_lea.hbm %s7, %s352
          %s354 = sshll.u32 %s353, 4
          %s355 = int_to_ptr.hbm [resolvable:$true] %s354
          %s356 = sshll.u32 %s348, 4
          %s357 = int_to_ptr.vmem [resolvable:$true] %s356
          %362 = dma.hbm_to_vmem [thread:$0]  %s355, 384, %s357, %s345, 128, 128, 8
        $region48: #{tpu_custom_call.1} parent=31 // pred_fallthru
          _
      $region32: #{tpu_custom_call.1} parent=5 // pred_fallthru
        _
      %p363 = scmp.le.s32.totalorder 1, %s22
      %p364 = scmp.lt.s32.totalorder %s22, 4
      %p365 = pnand %p363, %p364
      %p366 = pneg %p365
      // Predicated region
      $region49: #{tpu_custom_call.1} parent=5 // pred_check
        _
      $region50: #{tpu_custom_call.1} parent=5 // pred_check_branch
        %368 = sbr.rel (%p365) target = $region52
      $region51: #{tpu_custom_call.1} parent=5 // pred_region
        %s369 = ssub.s32 %s22, 1
        // Predicated region
        $region53: #{tpu_custom_call.1} parent=51 // pred_check
          %p370 = pneg %p64
        $region54: #{tpu_custom_call.1} parent=51 // pred_check_branch
          %372 = sbr.rel (%p370) target = $region56
        $region55: #{tpu_custom_call.1} parent=51 // pred_region
          %374 = dma.done [#allocation3], 256
        $region56: #{tpu_custom_call.1} parent=51 // pred_fallthru
          _
        // Predicated region
        $region57: #{tpu_custom_call.1} parent=51 // pred_check
          %p375 = pneg %p85
        $region58: #{tpu_custom_call.1} parent=51 // pred_check_branch
          %377 = sbr.rel (%p375) target = $region60
        $region59: #{tpu_custom_call.1} parent=51 // pred_region
          %379 = dma.done [#allocation6], 256
        $region60: #{tpu_custom_call.1} parent=51 // pred_fallthru
          _
        // Predicated region
        $region61: #{tpu_custom_call.1} parent=51 // pred_check
          %p380 = pneg %p106
        $region62: #{tpu_custom_call.1} parent=51 // pred_check_branch
          %382 = sbr.rel (%p380) target = $region64
        $region63: #{tpu_custom_call.1} parent=51 // pred_region
          %384 = dma.done [#allocation6], 6144
        $region64: #{tpu_custom_call.1} parent=51 // pred_fallthru
          _
        %s385 = sand.u32 %s27, 1
        %s386 = scalar_lea.sflag [#allocation9], %s385
        %s387 = sand.u32 %s145, 1
        %s388 = smul.addr %s387, 72
        %s389 = scalar_lea.vmem [#allocation8], %s388
        // Predicated region
        $region65: #{tpu_custom_call.1} parent=51 // pred_check
          %p390 = pneg %p158
        $region66: #{tpu_custom_call.1} parent=51 // pred_check_branch
          %392 = sbr.rel (%p390) target = $region68
        $region67: #{tpu_custom_call.1} parent=51 // pred_region
          %394 = dma.done %s386, 1152
        $region68: #{tpu_custom_call.1} parent=51 // pred_fallthru
          _
        %s395 = sand.u32 %s27, 1
        %s396 = scalar_lea.sflag [#allocation9], %s395
        %s397 = sand.u32 %s197, 1
        %s398 = smul.addr %s397, 24
        %s399 = scalar_lea.vmem [#allocation10], %s398
        // Predicated region
        $region69: #{tpu_custom_call.1} parent=51 // pred_check
          %p400 = pneg %p210
        $region70: #{tpu_custom_call.1} parent=51 // pred_check_branch
          %402 = sbr.rel (%p400) target = $region72
        $region71: #{tpu_custom_call.1} parent=51 // pred_region
          %404 = dma.done %s396, 384
        $region72: #{tpu_custom_call.1} parent=51 // pred_fallthru
          _
        %p405 = pneg %p43
        %p406 = pneg %p40
        %p407 = pneg %p64
        %p408 = pneg %p61
        %p409 = pneg %p85
        %p410 = pneg %p82
        %p411 = pneg %p106
        %p412 = pneg %p103
        %s413 = smul.u32 3, %s27
        %p414 = scmp.lt.s32.totalorder %s413, 8
        %s415 = scalar_select %p414, %s413, 8
        %s416 = smul.addr %s415, 8
        %s417 = scalar_lea.vmem %s4, %s416
        %p418 = pneg %p132
        %p419 = pneg %p129
        %s420 = sand.u32 %s27, 1
        %s421 = scalar_lea.sflag [#allocation9], %s420
        %s422 = sand.u32 %s145, 1
        %s423 = smul.addr %s422, 72
        %s424 = scalar_lea.vmem [#allocation8], %s423
        %p425 = pneg %p158
        %p426 = pneg %p155
        %s427 = smul.u32 3, %s27
        %p428 = scmp.lt.s32.totalorder %s427, 8
        %s429 = scalar_select %p428, %s427, 8
        %s430 = smul.addr %s429, 8
        %s431 = scalar_lea.vmem %s6, %s430
        %p432 = pneg %p184
        %p433 = pneg %p181
        %s434 = sand.u32 %s27, 1
        %s435 = scalar_lea.sflag [#allocation9], %s434
        %s436 = sand.u32 %s197, 1
        %s437 = smul.addr %s436, 24
        %s438 = scalar_lea.vmem [#allocation10], %s437
        %p439 = pneg %p210
        %p440 = pneg %p207
        %p441 = pneg %p236
        %p442 = pneg %p233
        %s443 = sand.u32 %s223, 1
        %s444 = scalar_lea.sflag [#allocation4], %s443
        %s445 = sand.u32 %s223, 1
        %s446 = smul.addr %s445, 72
        %s447 = scalar_lea.vmem [#allocation11], %s446
        %s448 = smul.u32 3, %s27
        %p449 = scmp.lt.s32.totalorder %s448, 8
        %s450 = scalar_select %p449, %s448, 8
        %s451 = smul.addr %s450, 8
        %s452 = scalar_lea.vmem %s4, %s451
        %s453 = smul.u32 3, %s27
        %s454 = smul.u32 3, %s27
        %s455 = smul.u32 3, %s27
        %p456 = scmp.lt.s32.totalorder %s455, 8
        %s457 = scalar_select %p456, %s455, 8
        %s458 = smul.addr %s457, 8
        %s459 = scalar_lea.vmem %s6, %s458
        %s460 = smul.u32 3, %s27
        %s461 = smul.u32 3, %s27
        %s462 = smul.u32 3, %s27
        %v463 = vld [vmem:[%s452] sm:$0xff]
        %v464 = vld [vmem:[%s452 + $0x8] sm:$0xff]
        %v465 = vld [vmem:[%s452 + $0x10] sm:$0xff]
        %v466 = vld [vmem:[%s0] sm:$0xff]
        %v467 = vld [vmem:[%s0 + $0x8] sm:$0xf]
        %vm468 = vcmask 97280
        %v470 = vsel %vm468, %v463, 0
        %v473 = vsel %vm468, %v464, 0
        %v476 = vsel %vm468, %v465, 0
        %vm478 = vcmask 1043456
        %v480 = vsel %vm478, %v467, 0
        %482 = vmatpush.msra.mxu0 0.0
        %483 = vmatpush.msra.mxu0 0.0
        %484 = vmatpush.msra.mxu0 0.0
        %485 = vmatpush.msra.mxu0 0.0
        %486 = vmatpush.msra.mxu0 0.0
        %487 = vmatpush.msra.mxu0 0.0
        %488 = vmatpush.msra.mxu0 0.0
        %489 = vmatpush.msra.mxu0 0.0
        %490 = vmatpush.msra.mxu0 0.0
        %491 = vmatpush.msra.mxu0 0.0
        %492 = vmatpush.msra.mxu0 0.0
        %493 = vmatpush.msra.mxu0 0.0
        %494 = vmatpush.msra.mxu0 0.0
        %495 = vmatpush.msra.mxu0 0.0
        %496 = vmatpush.msra.mxu0 %v480
        %497 = vmatpush.msra.mxu0 %v466
        %498 = vmatmul.f32.gmra.mxu0 %v470
        %v499 = vpop.f32.mrf.mxu0
        %v500 = vadd.f32 0.0, %v499
        %501 = vmatmul.f32.gmra.mxu0 %v473
        %v502 = vpop.f32.mrf.mxu0
        %v503 = vadd.f32 0.0, %v502
        %504 = vmatmul.f32.gmra.mxu0 %v476
        %v505 = vpop.f32.mrf.mxu0
        %v506 = vadd.f32 0.0, %v505
        %507 = vdwg.mxu0
        %v508 = vld [vmem:[#allocation2] sm:$0xff]
        %v509 = vld [vmem:[#allocation2 + $0x8] sm:$0xf]
        %v511 = vsel %vm478, %v509, 0
        %513 = vmatpush.msra.mxu0 0.0
        %514 = vmatpush.msra.mxu0 0.0
        %515 = vmatpush.msra.mxu0 0.0
        %516 = vmatpush.msra.mxu0 0.0
        %517 = vmatpush.msra.mxu0 0.0
        %518 = vmatpush.msra.mxu0 0.0
        %519 = vmatpush.msra.mxu0 0.0
        %520 = vmatpush.msra.mxu0 0.0
        %521 = vmatpush.msra.mxu0 0.0
        %522 = vmatpush.msra.mxu0 0.0
        %523 = vmatpush.msra.mxu0 0.0
        %524 = vmatpush.msra.mxu0 0.0
        %525 = vmatpush.msra.mxu0 0.0
        %526 = vmatpush.msra.mxu0 0.0
        %527 = vmatpush.msra.mxu0 %v511
        %528 = vmatpush.msra.mxu0 %v508
        %529 = vmatmul.f32.gmra.mxu0 %v470
        %v530 = vpop.f32.mrf.mxu0
        %v531 = vadd.f32 0.0, %v530
        %532 = vmatmul.f32.gmra.mxu0 %v473
        %v533 = vpop.f32.mrf.mxu0
        %v534 = vadd.f32 0.0, %v533
        %535 = vmatmul.f32.gmra.mxu0 %v476
        %v536 = vpop.f32.mrf.mxu0
        %v537 = vadd.f32 0.0, %v536
        %538 = vdwg.mxu0
        %v539 = vld [vmem:[#allocation5] sm:$0xff]
        %v540 = vld [vmem:[#allocation5 + $0x8] sm:$0xf]
        %v542 = vsel %vm478, %v540, 0
        %544 = vmatpush.msra.mxu0 0.0
        %545 = vmatpush.msra.mxu0 0.0
        %546 = vmatpush.msra.mxu0 0.0
        %547 = vmatpush.msra.mxu0 0.0
        %548 = vmatpush.msra.mxu0 0.0
        %549 = vmatpush.msra.mxu0 0.0
        %550 = vmatpush.msra.mxu0 0.0
        %551 = vmatpush.msra.mxu0 0.0
        %552 = vmatpush.msra.mxu0 0.0
        %553 = vmatpush.msra.mxu0 0.0
        %554 = vmatpush.msra.mxu0 0.0
        %555 = vmatpush.msra.mxu0 0.0
        %556 = vmatpush.msra.mxu0 0.0
        %557 = vmatpush.msra.mxu0 0.0
        %558 = vmatpush.msra.mxu0 %v542
        %559 = vmatpush.msra.mxu0 %v539
        %560 = vmatmul.f32.gmra.mxu0 %v470
        %v561 = vpop.f32.mrf.mxu0
        %v562 = vadd.f32 0.0, %v561
        %563 = vmatmul.f32.gmra.mxu0 %v473
        %v564 = vpop.f32.mrf.mxu0
        %v565 = vadd.f32 0.0, %v564
        %566 = vmatmul.f32.gmra.mxu0 %v476
        %v567 = vpop.f32.mrf.mxu0
        %v568 = vadd.f32 0.0, %v567
        %569 = vdwg.mxu0
        %v570 = vmax.f32 %v500, 0.0
        %v571 = vmax.f32 %v503, 0.0
        %v572 = vmax.f32 %v506, 0.0
        %v573 = vld [vmem:[%s459] sm:$0xff]
        %v574 = vld [vmem:[%s459 + $0x8] sm:$0xff]
        %v575 = vld [vmem:[%s459 + $0x10] sm:$0xff]
        %v576 = vsub.f32 %v573, 1.0
        %v577 = vsub.f32 %v574, 1.0
        %v578 = vsub.f32 %v575, 1.0
        %vm579 = vcmp.gt.f32.partialorder %v576, 20.0
        %vm580 = vcmp.gt.f32.partialorder %v577, 20.0
        %vm581 = vcmp.gt.f32.partialorder %v578, 20.0
        %v582 = vmin.f32 %v576, 20.0
        %v583 = vmin.f32 %v577, 20.0
        %v584 = vmin.f32 %v578, 20.0
        %v585 = vmul.f32 %v582, 1.442695
        %v586 = vpow.pop %v585
        %v587 = vmul.f32 %v583, 1.442695
        %v588 = vpow.pop %v587
        %v589 = vmul.f32 %v584, 1.442695
        %v590 = vpow.pop %v589
        %v591 = vadd.f32 %v586, 1.0
        %v592 = vadd.f32 %v588, 1.0
        %v593 = vadd.f32 %v590, 1.0
        %v594 = vlog2.pop %v591
        %v595 = vmul.f32 %v594, 0.6931472
        %v596 = vlog2.pop %v592
        %v597 = vmul.f32 %v596, 0.6931472
        %v598 = vlog2.pop %v593
        %v599 = vmul.f32 %v598, 0.6931472
        %v600 = vsel %vm579, %v576, %v595
        %v601 = vsel %vm580, %v577, %v597
        %v602 = vsel %vm581, %v578, %v599
        %v603 = vld [vmem:[%s399] sm:$0xff]
        %v604 = vld [vmem:[%s399 + $0x8] sm:$0xff]
        %v605 = vld [vmem:[%s399 + $0x10] sm:$0xff]
        %v606 = vsub.f32 %v603, 1.0
        %v607 = vsub.f32 %v604, 1.0
        %v608 = vsub.f32 %v605, 1.0
        %vm609 = vcmp.gt.f32.partialorder %v606, 20.0
        %vm610 = vcmp.gt.f32.partialorder %v607, 20.0
        %vm611 = vcmp.gt.f32.partialorder %v608, 20.0
        %v612 = vmin.f32 %v606, 20.0
        %v613 = vmin.f32 %v607, 20.0
        %v614 = vmin.f32 %v608, 20.0
        %v615 = vmul.f32 %v612, 1.442695
        %v616 = vpow.pop %v615
        %v617 = vmul.f32 %v613, 1.442695
        %v618 = vpow.pop %v617
        %v619 = vmul.f32 %v614, 1.442695
        %v620 = vpow.pop %v619
        %v621 = vadd.f32 %v616, 1.0
        %v622 = vadd.f32 %v618, 1.0
        %v623 = vadd.f32 %v620, 1.0
        %v624 = vlog2.pop %v621
        %v625 = vmul.f32 %v624, 0.6931472
        %v626 = vlog2.pop %v622
        %v627 = vmul.f32 %v626, 0.6931472
        %v628 = vlog2.pop %v623
        %v629 = vmul.f32 %v628, 0.6931472
        %v630 = vsel %vm609, %v606, %v625
        %v631 = vsel %vm610, %v607, %v627
        %v632 = vsel %vm611, %v608, %v629
        %v633 = vsub.f32 0.0, %v600
        %v634 = vsub.f32 0.0, %v601
        %v635 = vsub.f32 0.0, %v602
        %v636 = vmul.f32 %v531, %v531
        %v637 = vmul.f32 %v534, %v534
        %v638 = vmul.f32 %v537, %v537
        %v639 = vmul.f32 %v633, %v636
        %v640 = vmul.f32 %v634, %v637
        %v641 = vmul.f32 %v635, %v638
        %v642 = vmul.f32 %v562, %v562
        %v643 = vmul.f32 %v565, %v565
        %v644 = vmul.f32 %v568, %v568
        %v645 = vmul.f32 %v630, %v642
        %v646 = vmul.f32 %v631, %v643
        %v647 = vmul.f32 %v632, %v644
        %v648 = vsub.f32 %v639, %v645
        %v649 = vsub.f32 %v640, %v646
        %v650 = vsub.f32 %v641, %v647
        %v651 = vmul.f32 %v648, 1.442695
        %v652 = vpow.pop %v651
        %v653 = vmul.f32 %v649, 1.442695
        %v654 = vpow.pop %v653
        %v655 = vmul.f32 %v650, 1.442695
        %v656 = vpow.pop %v655
        %v657 = vmul.f32 %v570, %v652
        %v658 = vmul.f32 %v571, %v654
        %v659 = vmul.f32 %v572, %v656
        %v660 = vld [vmem:[#allocation7] sm:$0xff]
        %v661 = vld [vmem:[#allocation7 + $0x8] sm:$0xff]
        %v662 = vld [vmem:[#allocation7 + $0x10] sm:$0xff]
        %v663 = vld [vmem:[#allocation7 + $0x18] sm:$0xff]
        %v664 = vld [vmem:[#allocation7 + $0x20] sm:$0xff]
        %v665 = vld [vmem:[#allocation7 + $0x28] sm:$0xff]
        %v666 = vld [vmem:[#allocation7 + $0x30] sm:$0xff]
        %v667 = vld [vmem:[#allocation7 + $0x38] sm:$0xff]
        %v668 = vld [vmem:[#allocation7 + $0x40] sm:$0xff]
        %v669 = vld [vmem:[#allocation7 + $0x48] sm:$0xff]
        %v670 = vld [vmem:[#allocation7 + $0x50] sm:$0xff]
        %v671 = vld [vmem:[#allocation7 + $0x58] sm:$0xff]
        %v672 = vld [vmem:[#allocation7 + $0x60] sm:$0xff]
        %v673 = vld [vmem:[#allocation7 + $0x68] sm:$0xff]
        %v674 = vld [vmem:[#allocation7 + $0x70] sm:$0xff]
        %v675 = vld [vmem:[#allocation7 + $0x78] sm:$0xff]
        %v676 = vld [vmem:[#allocation7 + $0x80] sm:$0xff]
        %v677 = vld [vmem:[#allocation7 + $0x88] sm:$0xff]
        %v678 = vld [vmem:[#allocation7 + $0x90] sm:$0xff]
        %v679 = vld [vmem:[#allocation7 + $0x98] sm:$0xff]
        %v680 = vld [vmem:[#allocation7 + $0xa0] sm:$0xff]
        %v681 = vld [vmem:[#allocation7 + $0xa8] sm:$0xff]
        %v682 = vld [vmem:[#allocation7 + $0xb0] sm:$0xff]
        %v683 = vld [vmem:[#allocation7 + $0xb8] sm:$0xff]
        %v684 = vld [vmem:[#allocation7 + $0xc0] sm:$0xff]
        %v685 = vld [vmem:[#allocation7 + $0xc8] sm:$0xff]
        %v686 = vld [vmem:[#allocation7 + $0xd0] sm:$0xff]
        %v687 = vld [vmem:[#allocation7 + $0xd8] sm:$0xff]
        %v688 = vld [vmem:[#allocation7 + $0xe0] sm:$0xff]
        %v689 = vld [vmem:[#allocation7 + $0xe8] sm:$0xff]
        %v690 = vld [vmem:[#allocation7 + $0xf0] sm:$0xff]
        %v691 = vld [vmem:[#allocation7 + $0xf8] sm:$0xff]
        %v692 = vld [vmem:[#allocation7 + $0x100] sm:$0xff]
        %v693 = vld [vmem:[#allocation7 + $0x108] sm:$0xff]
        %v694 = vld [vmem:[#allocation7 + $0x110] sm:$0xff]
        %v695 = vld [vmem:[#allocation7 + $0x118] sm:$0xff]
        %v696 = vld [vmem:[#allocation7 + $0x120] sm:$0xff]
        %v697 = vld [vmem:[#allocation7 + $0x128] sm:$0xff]
        %v698 = vld [vmem:[#allocation7 + $0x130] sm:$0xff]
        %v699 = vld [vmem:[#allocation7 + $0x138] sm:$0xff]
        %v700 = vld [vmem:[#allocation7 + $0x140] sm:$0xff]
        %v701 = vld [vmem:[#allocation7 + $0x148] sm:$0xff]
        %v702 = vld [vmem:[#allocation7 + $0x150] sm:$0xff]
        %v703 = vld [vmem:[#allocation7 + $0x158] sm:$0xff]
        %v704 = vld [vmem:[#allocation7 + $0x160] sm:$0xff]
        %v705 = vld [vmem:[#allocation7 + $0x168] sm:$0xff]
        %v706 = vld [vmem:[#allocation7 + $0x170] sm:$0xff]
        %v707 = vld [vmem:[#allocation7 + $0x178] sm:$0xff]
        %708 = vmatpush.msra.mxu0 %v705
        %709 = vmatpush.msra.mxu0 %v702
        %710 = vmatpush.msra.mxu0 %v699
        %711 = vmatpush.msra.mxu0 %v696
        %712 = vmatpush.msra.mxu0 %v693
        %713 = vmatpush.msra.mxu0 %v690
        %714 = vmatpush.msra.mxu0 %v687
        %715 = vmatpush.msra.mxu0 %v684
        %716 = vmatpush.msra.mxu0 %v681
        %717 = vmatpush.msra.mxu0 %v678
        %718 = vmatpush.msra.mxu0 %v675
        %719 = vmatpush.msra.mxu0 %v672
        %720 = vmatpush.msra.mxu0 %v669
        %721 = vmatpush.msra.mxu0 %v666
        %722 = vmatpush.msra.mxu0 %v663
        %723 = vmatpush.msra.mxu0 %v660
        %724 = vmatmul.f32.gmra.mxu0 %v657
        %v725 = vpop.f32.mrf.mxu0
        %v726 = vadd.f32 0.0, %v725
        %727 = vmatmul.f32.gmra.mxu0 %v658
        %v728 = vpop.f32.mrf.mxu0
        %v729 = vadd.f32 0.0, %v728
        %730 = vmatmul.f32.gmra.mxu0 %v659
        %v731 = vpop.f32.mrf.mxu0
        %v732 = vadd.f32 0.0, %v731
        %733 = vdwg.mxu0
        %734 = vmatpush.msra.mxu0 %v706
        %735 = vmatpush.msra.mxu0 %v703
        %736 = vmatpush.msra.mxu0 %v700
        %737 = vmatpush.msra.mxu0 %v697
        %738 = vmatpush.msra.mxu0 %v694
        %739 = vmatpush.msra.mxu0 %v691
        %740 = vmatpush.msra.mxu0 %v688
        %741 = vmatpush.msra.mxu0 %v685
        %742 = vmatpush.msra.mxu0 %v682
        %743 = vmatpush.msra.mxu0 %v679
        %744 = vmatpush.msra.mxu0 %v676
        %745 = vmatpush.msra.mxu0 %v673
        %746 = vmatpush.msra.mxu0 %v670
        %747 = vmatpush.msra.mxu0 %v667
        %748 = vmatpush.msra.mxu0 %v664
        %749 = vmatpush.msra.mxu0 %v661
        %750 = vmatmul.f32.gmra.mxu0 %v657
        %v751 = vpop.f32.mrf.mxu0
        %v752 = vadd.f32 0.0, %v751
        %753 = vmatmul.f32.gmra.mxu0 %v658
        %v754 = vpop.f32.mrf.mxu0
        %v755 = vadd.f32 0.0, %v754
        %756 = vmatmul.f32.gmra.mxu0 %v659
        %v757 = vpop.f32.mrf.mxu0
        %v758 = vadd.f32 0.0, %v757
        %759 = vdwg.mxu0
        %760 = vmatpush.msra.mxu0 %v707
        %761 = vmatpush.msra.mxu0 %v704
        %762 = vmatpush.msra.mxu0 %v701
        %763 = vmatpush.msra.mxu0 %v698
        %764 = vmatpush.msra.mxu0 %v695
        %765 = vmatpush.msra.mxu0 %v692
        %766 = vmatpush.msra.mxu0 %v689
        %767 = vmatpush.msra.mxu0 %v686
        %768 = vmatpush.msra.mxu0 %v683
        %769 = vmatpush.msra.mxu0 %v680
        %770 = vmatpush.msra.mxu0 %v677
        %771 = vmatpush.msra.mxu0 %v674
        %772 = vmatpush.msra.mxu0 %v671
        %773 = vmatpush.msra.mxu0 %v668
        %774 = vmatpush.msra.mxu0 %v665
        %775 = vmatpush.msra.mxu0 %v662
        %776 = vmatmul.f32.gmra.mxu0 %v657
        %v777 = vpop.f32.mrf.mxu0
        %v778 = vadd.f32 0.0, %v777
        %779 = vmatmul.f32.gmra.mxu0 %v658
        %v780 = vpop.f32.mrf.mxu0
        %v781 = vadd.f32 0.0, %v780
        %782 = vmatmul.f32.gmra.mxu0 %v659
        %v783 = vpop.f32.mrf.mxu0
        %v784 = vadd.f32 0.0, %v783
        %785 = vdwg.mxu0
        %v786 = vld [vmem:[%s389] sm:$0xff]
        %v787 = vld [vmem:[%s389 + $0x8] sm:$0xff]
        %v788 = vld [vmem:[%s389 + $0x10] sm:$0xff]
        %v789 = vld [vmem:[%s389 + $0x18] sm:$0xff]
        %v790 = vld [vmem:[%s389 + $0x20] sm:$0xff]
        %v791 = vld [vmem:[%s389 + $0x28] sm:$0xff]
        %v792 = vld [vmem:[%s389 + $0x30] sm:$0xff]
        %v793 = vld [vmem:[%s389 + $0x38] sm:$0xff]
        %v794 = vld [vmem:[%s389 + $0x40] sm:$0xff]
        %v795 = vmul.f32 %v786, %v726
        %v796 = vmul.f32 %v787, %v752
        %v797 = vmul.f32 %v788, %v778
        %v798 = vmul.f32 %v789, %v729
        %v799 = vmul.f32 %v790, %v755
        %v800 = vmul.f32 %v791, %v781
        %v801 = vmul.f32 %v792, %v732
        %v802 = vmul.f32 %v793, %v758
        %v803 = vmul.f32 %v794, %v784
        %804 = vst [vmem:[%s447] sm:$0xff] %v795
        %805 = vst [vmem:[%s447 + $0x8] sm:$0xff] %v796
        %806 = vst [vmem:[%s447 + $0x10] sm:$0xff] %v797
        %807 = vst [vmem:[%s447 + $0x18] sm:$0xff] %v798
        %808 = vst [vmem:[%s447 + $0x20] sm:$0xff] %v799
        %809 = vst [vmem:[%s447 + $0x28] sm:$0xff] %v800
        %810 = vst [vmem:[%s447 + $0x30] sm:$0xff] %v801
        %811 = vst [vmem:[%s447 + $0x38] sm:$0xff] %v802
        %812 = vst [vmem:[%s447 + $0x40] sm:$0xff] %v803
        %s813 = sand.u32 %s223, 1
        %s814 = scalar_lea.sflag [#allocation4], %s813
        %s815 = sand.u32 %s223, 1
        %s816 = smul.addr %s815, 72
        %s817 = scalar_lea.vmem [#allocation11], %s816
        // Predicated region
        $region73: #{tpu_custom_call.1} parent=51 // pred_check
          %p818 = pneg %p233
        $region74: #{tpu_custom_call.1} parent=51 // pred_check_branch
          %820 = sbr.rel (%p818) target = $region76
        $region75: #{tpu_custom_call.1} parent=51 // pred_region
          %s821 = smul.u32 3, %s27
          %823 = vsyncadd %s814, 0
          %s824 = smul.addr %s821, 3
          %s825 = smul.addr %s824, 8
          %s826 = scalar_lea.hbm %s8, %s825
          %s827 = sshll.u32 %s817, 4
          %s828 = int_to_ptr.vmem [resolvable:$true] %s827
          %s829 = sshll.u32 %s826, 4
          %s830 = int_to_ptr.hbm [resolvable:$true] %s829
          %835 = dma.vmem_to_hbm [thread:$0]  %s828, 1152, %s830, %s814, 384, 384, 24
        $region76: #{tpu_custom_call.1} parent=51 // pred_fallthru
          _
      $region52: #{tpu_custom_call.1} parent=5 // pred_fallthru
        _
      %p836 = scmp.le.s32.totalorder 2, %s22
      // Predicated region
      $region77: #{tpu_custom_call.1} parent=5 // pred_check
        %p837 = pneg %p836
      $region78: #{tpu_custom_call.1} parent=5 // pred_check_branch
        %839 = sbr.rel (%p837) target = $region80
      $region79: #{tpu_custom_call.1} parent=5 // pred_region
        %s840 = ssub.s32 %s22, 2
        // Predicated region
        $region81: #{tpu_custom_call.1} parent=79 // pred_check
          %p841 = pneg %p239
        $region82: #{tpu_custom_call.1} parent=79 // pred_check_branch
          %843 = sbr.rel (%p841) target = $region84
        $region83: #{tpu_custom_call.1} parent=79 // pred_region
          %s844 = sand.u32 %s224, 1
          %s845 = scalar_lea.sflag [#allocation4], %s844
          %s846 = sand.u32 %s224, 1
          %s847 = smul.addr %s846, 72
          %s848 = scalar_lea.vmem [#allocation11], %s847
          %850 = dma.done %s845, 1152
        $region84: #{tpu_custom_call.1} parent=79 // pred_fallthru
          _
      $region80: #{tpu_custom_call.1} parent=5 // pred_fallthru
        _
    $region6: #{tpu_custom_call.1} parent=1 // loop_footer
      %s26 = sadd.s32 1, %s22
    $region7: #{tpu_custom_call.1} parent=1 // loop_footer_branch
      %21 = sbr.rel target = $region3
    $region8: #{tpu_custom_call.1} parent=1 // loop_exit
      _
    %851 = vsyncpa [#allocation3], 1
    %s852 = scalar_lea.sflag [#allocation3], 1
    %853 = vsyncpa %s852, 1
    %854 = vsyncpa [#allocation6], 1
    %855 = vsyncpa [#allocation9], 1
    %s856 = scalar_lea.sflag [#allocation9], 1
    %857 = vsyncpa %s856, 1
    %858 = vsyncpa [#allocation4], 1
    %s859 = scalar_lea.sflag [#allocation4], 1
    %860 = vsyncpa %s859, 1

</llo_original>
